<compile_context>
chip_gen: v6e
topology: v6e:2x2x1
jax: 0.10.0
libtpu: 0.0.40
codegen_flags: <defaults>
</compile_context>

<pallas_src>
import functools

import jax
import jax.numpy as jnp
from jax.experimental import pallas as pl
from jax.experimental.pallas import tpu as pltpu

EPS = 1e-5


# ---------------------------------------------------------------------------
# Fused kernel: whole BaseBlock forward in one invocation
# ---------------------------------------------------------------------------
def fused_baseblock_kernel(x_ref, wcat_ref, w2_ref, bu_ref,
                           g1_ref, be1_ref, g2_ref, be2_ref,
                           o_ref, *, dim_hidden):
    # --- layer1 and upsample share x as LHS: one MXU pass over [w1 | wu] ----
    xb = x_ref[...].astype(jnp.bfloat16)
    hcat = jnp.dot(xb, wcat_ref[...], preferred_element_type=jnp.float32)
    h1 = hcat[:, :dim_hidden]          # lane-aligned slice (H multiple of 128)
    skip = hcat[:, dim_hidden:]

    # --- BN1 (training mode: full-batch stats, biased variance) + ReLU ------
    m1 = jnp.mean(h1, axis=0, keepdims=True)
    d1 = h1 - m1
    v1 = jnp.mean(d1 * d1, axis=0, keepdims=True)        # centered two-pass
    sc1 = g1_ref[...] * jax.lax.rsqrt(v1 + EPS)
    h = jnp.maximum(d1 * sc1 + be1_ref[...], 0.0)

    # --- layer2 --------------------------------------------------------------
    z = jnp.dot(h.astype(jnp.bfloat16), w2_ref[...],
                preferred_element_type=jnp.float32)

    # --- BN2 + skip (+ upsample bias) + ReLU ---------------------------------
    m2 = jnp.mean(z, axis=0, keepdims=True)
    d2 = z - m2
    v2 = jnp.mean(d2 * d2, axis=0, keepdims=True)
    sc2 = g2_ref[...] * jax.lax.rsqrt(v2 + EPS)
    o_ref[...] = jnp.maximum(d2 * sc2 + be2_ref[...] + skip + bu_ref[...], 0.0)


# ---------------------------------------------------------------------------
# Host wrapper
# ---------------------------------------------------------------------------
def _vmem_budget_bytes():
    try:
        cap = pltpu.get_tpu_info().vmem_capacity_bytes
    except Exception:
        cap = 64 * 1024 * 1024   # v7x physical VMEM (smallest listed generation)
    return int(cap * 3 // 4)


def baseblock_forward(x, params):
    w_cat, w2, bu, g1, be1, g2, be2 = params
    B, dim_in = x.shape
    H, O = w2.shape
    assert w_cat.shape == (dim_in, H + O)
    assert B % 8 == 0, "batch must be sublane-aligned (multiple of 8)"
    assert dim_in % 128 == 0 and H % 128 == 0 and O % 128 == 0, "lane-dense dims"

    # HBM traffic of the fused kernel (everything is read/written exactly once).
    io_bytes = (x.size * 4 + w_cat.size * 2 + w2.size * 2
                + (bu.size + g1.size + be1.size + g2.size + be2.size) * 4
                + B * O * 4)
    # VMEM footprint: I/O blocks (x2 for Pallas' default double-buffering)
    # plus in-kernel intermediates (hcat, h, z) and slack.
    interm_bytes = B * (H + O) * 4 + B * H * 4 + B * O * 4
    need = 2 * io_bytes + 2 * interm_bytes + (1 << 20)
    budget = _vmem_budget_bytes()
    assert need <= budget, f"fused kernel needs {need} B VMEM, budget {budget} B"

    cp = pltpu.CompilerParams(
        dimension_semantics=("arbitrary",),   # single fused step; no megacore split
        vmem_limit_bytes=budget,              # generation-aware, not hardcoded
    )
    flops = 2 * B * dim_in * (H + O) + 2 * B * H * O + 12 * B * (H + O)
    cost = pl.CostEstimate(flops=flops, transcendentals=H + O,
                           bytes_accessed=io_bytes)

    return pl.pallas_call(
        functools.partial(fused_baseblock_kernel, dim_hidden=H),
        grid=(1,),                            # whole batch in one VMEM-resident step
        in_specs=[
            pl.BlockSpec((B, dim_in), lambda i: (0, 0)),
            pl.BlockSpec((dim_in, H + O), lambda i: (0, 0)),
            pl.BlockSpec((H, O), lambda i: (0, 0)),
            pl.BlockSpec((1, O), lambda i: (0, 0)),
            pl.BlockSpec((1, H), lambda i: (0, 0)),
            pl.BlockSpec((1, H), lambda i: (0, 0)),
            pl.BlockSpec((1, O), lambda i: (0, 0)),
            pl.BlockSpec((1, O), lambda i: (0, 0)),
        ],
        out_specs=pl.BlockSpec((B, O), lambda i: (0, 0)),
        out_shape=jax.ShapeDtypeStruct((B, O), jnp.float32),
        compiler_params=cp,
        cost_estimate=cost,
    )(x, w_cat, w2, bu, g1, be1, g2, be2)


# ---------------------------------------------------------------------------
# Params (PyTorch-style init) and references
# ---------------------------------------------------------------------------
def init_raw_params(key, dim_in, dim_hidden, dim_out):
    ks = jax.random.split(key, 6)
    s1 = 1.0 / jnp.sqrt(dim_in)
    s2 = 1.0 / jnp.sqrt(dim_hidden)
    w1 = jax.random.uniform(ks[0], (dim_in, dim_hidden), jnp.float32, -s1, s1)
    b1 = jax.random.uniform(ks[1], (dim_hidden,), jnp.float32, -s1, s1)
    w2 = jax.random.uniform(ks[2], (dim_hidden, dim_out), jnp.float32, -s2, s2)
    b2 = jax.random.uniform(ks[3], (dim_out,), jnp.float32, -s2, s2)
    wu = jax.random.uniform(ks[4], (dim_in, dim_out), jnp.float32, -s1, s1)
    bu = jax.random.uniform(ks[5], (dim_out,), jnp.float32, -s1, s1)
    g1 = jnp.ones((dim_hidden,), jnp.float32)
    be1 = jnp.zeros((dim_hidden,), jnp.float32)
    g2 = jnp.ones((dim_out,), jnp.float32)
    be2 = jnp.zeros((dim_out,), jnp.float32)
    return (w1, b1, w2, b2, wu, bu, g1, be1, g2, be2)


def pack_params(raw):
    # b1/b2 are omitted from the kernel: a per-feature bias immediately before
    # training-mode BatchNorm is cancelled exactly by the mean subtraction.
    w1, b1, w2, b2, wu, bu, g1, be1, g2, be2 = raw
    w_cat = jnp.concatenate([w1, wu], axis=1).astype(jnp.bfloat16)   # [Din, H+O]
    return (w_cat, w2.astype(jnp.bfloat16), bu.reshape(1, -1),
            g1.reshape(1, -1), be1.reshape(1, -1),
            g2.reshape(1, -1), be2.reshape(1, -1))


def _bn_train(h, g, b):
    m = jnp.mean(h, axis=0, keepdims=True)
    d = h - m
    v = jnp.mean(d * d, axis=0, keepdims=True)            # biased variance
    return d * jax.lax.rsqrt(v + EPS) * g + b


def reference_pytorch_f32(x, raw):
    """Exact PyTorch BaseBlock semantics in f32 (with layer biases, training BN)."""
    w1, b1, w2, b2, wu, bu, g1, be1, g2, be2 = raw
    h = jnp.maximum(_bn_train(x @ w1 + b1, g1, be1), 0.0)
    z = _bn_train(h @ w2 + b2, g2, be2)
    return jnp.maximum(z + (x @ wu + bu), 0.0)


def reference_matched(x, params):
    """Same numerics as the kernel (bf16 MXU, f32 accumulate, biases folded)."""
    w_cat, w2, bu, g1, be1, g2, be2 = params
    H = w2.shape[0]
    hcat = jnp.dot(x.astype(jnp.bfloat16), w_cat, preferred_element_type=jnp.float32)
    h1, skip = hcat[:, :H], hcat[:, H:]
    h = jnp.maximum(_bn_train(h1, g1, be1), 0.0)
    z = _bn_train(jnp.dot(h.astype(jnp.bfloat16), w2,
                          preferred_element_type=jnp.float32), g2, be2)
    return jnp.maximum(z + skip + bu, 0.0)


if __name__ == "__main__":
    B, DIM_IN, DIM_HIDDEN, DIM_OUT = 64, 128, 256, 128

    key = jax.random.PRNGKey(0)
    kx, kp = jax.random.split(key)
    x = jax.random.normal(kx, (B, DIM_IN), jnp.float32)
    raw = init_raw_params(kp, DIM_IN, DIM_HIDDEN, DIM_OUT)
    params = pack_params(raw)

    fwd = jax.jit(baseblock_forward)
    out = jax.block_until_ready(fwd(x, params))
    assert out.shape == (B, DIM_OUT)

    # Tight check vs a reference that mirrors the kernel's bf16-MXU numerics.
    ref_m = reference_matched(x, params)
    assert jnp.allclose(out, ref_m, atol=2e-3, rtol=2e-3), "mismatch vs matched ref"

    # Loose check vs the exact fp32 PyTorch-module semantics (difference is the
    # intentional bf16 MXU operands; accumulation and all BN math are f32).
    ref_f32 = reference_pytorch_f32(x, raw)
    assert float(jnp.max(jnp.abs(out - ref_f32))) < 0.1, "drift vs fp32 module"

    print("KERNEL_OK")
</pallas_src>

<mosaic_0001>
module attributes {stable_mosaic.version = 11 : i64} {
  func.func @fused_baseblock_kernel(%arg0: i32, %arg1: memref<64x128xf32, #tpu.memory_space<vmem>>, %arg2: memref<128x384xbf16, #tpu.memory_space<vmem>>, %arg3: memref<256x128xbf16, #tpu.memory_space<vmem>>, %arg4: memref<1x128xf32, #tpu.memory_space<vmem>>, %arg5: memref<1x256xf32, #tpu.memory_space<vmem>>, %arg6: memref<1x256xf32, #tpu.memory_space<vmem>>, %arg7: memref<1x128xf32, #tpu.memory_space<vmem>>, %arg8: memref<1x128xf32, #tpu.memory_space<vmem>>, %arg9: memref<64x128xf32, #tpu.memory_space<vmem>>) attributes {dimension_semantics = [#tpu.dimension_semantics<arbitrary>], iteration_bounds = array<i64: 1>, scalar_prefetch = 0 : i64, scratch_operands = 0 : i64, tpu.core_type = #tpu.core_type<tc>, window_params = [{pipeline_mode = #tpu.pipeline_mode<synchronous>, transform_indices = @transform_0, window_bounds = array<i64: 64, 128>}, {pipeline_mode = #tpu.pipeline_mode<synchronous>, transform_indices = @transform_1, window_bounds = array<i64: 128, 384>}, {pipeline_mode = #tpu.pipeline_mode<synchronous>, transform_indices = @transform_2, window_bounds = array<i64: 256, 128>}, {pipeline_mode = #tpu.pipeline_mode<synchronous>, transform_indices = @transform_3, window_bounds = array<i64: 1, 128>}, {pipeline_mode = #tpu.pipeline_mode<synchronous>, transform_indices = @transform_4, window_bounds = array<i64: 1, 256>}, {pipeline_mode = #tpu.pipeline_mode<synchronous>, transform_indices = @transform_5, window_bounds = array<i64: 1, 256>}, {pipeline_mode = #tpu.pipeline_mode<synchronous>, transform_indices = @transform_6, window_bounds = array<i64: 1, 128>}, {pipeline_mode = #tpu.pipeline_mode<synchronous>, transform_indices = @transform_7, window_bounds = array<i64: 1, 128>}, {pipeline_mode = #tpu.pipeline_mode<synchronous>, transform_indices = @transform_8, window_bounds = array<i64: 64, 128>}]} {
    %c0 = arith.constant 0 : index
    %c0_0 = arith.constant 0 : index
    %0 = vector.load %arg1[%c0, %c0_0] : memref<64x128xf32, #tpu.memory_space<vmem>>, vector<64x128xf32>
    %1 = arith.truncf %0 : vector<64x128xf32> to vector<64x128xbf16>
    %c0_1 = arith.constant 0 : index
    %c0_2 = arith.constant 0 : index
    %2 = vector.load %arg2[%c0_1, %c0_2] : memref<128x384xbf16, #tpu.memory_space<vmem>>, vector<128x384xbf16>
    %cst = arith.constant dense<0.000000e+00> : vector<64x384xf32>
    %3 = tpu.matmul %1, %2, %cst {dimension_numbers = #tpu.dot_dimension_numbers<[1], [0], [0], [1], [0, 0, 1, 1], [], []>} : vector<64x128xbf16>, vector<128x384xbf16>, vector<64x384xf32> -> vector<64x384xf32>
    %4 = vector.extract_strided_slice %3 {offsets = [0, 0], sizes = [64, 256], strides = [1, 1]} : vector<64x384xf32> to vector<64x256xf32>
    %5 = vector.extract_strided_slice %3 {offsets = [0, 256], sizes = [64, 128], strides = [1, 1]} : vector<64x384xf32> to vector<64x128xf32>
    %cst_3 = arith.constant dense<0.000000e+00> : vector<256xf32>
    %6 = vector.multi_reduction <add>, %4, %cst_3 [0] : vector<64x256xf32> to vector<256xf32>
    %7 = vector.shape_cast %6 : vector<256xf32> to vector<1x256xf32>
    %cst_4 = arith.constant 6.400000e+01 : f32
    %8 = vector.broadcast %cst_4 : f32 to vector<1x256xf32>
    %9 = arith.divf %7, %8 : vector<1x256xf32>
    %10 = vector.broadcast %9 : vector<1x256xf32> to vector<64x256xf32>
    %11 = arith.subf %4, %10 : vector<64x256xf32>
    %12 = arith.mulf %11, %11 : vector<64x256xf32>
    %cst_5 = arith.constant dense<0.000000e+00> : vector<256xf32>
    %13 = vector.multi_reduction <add>, %12, %cst_5 [0] : vector<64x256xf32> to vector<256xf32>
    %14 = vector.shape_cast %13 : vector<256xf32> to vector<1x256xf32>
    %cst_6 = arith.constant 6.400000e+01 : f32
    %15 = vector.broadcast %cst_6 : f32 to vector<1x256xf32>
    %16 = arith.divf %14, %15 : vector<1x256xf32>
    %c0_7 = arith.constant 0 : index
    %c0_8 = arith.constant 0 : index
    %17 = vector.load %arg5[%c0_7, %c0_8] : memref<1x256xf32, #tpu.memory_space<vmem>>, vector<1x256xf32>
    %cst_9 = arith.constant 9.99999974E-6 : f32
    %18 = vector.broadcast %cst_9 : f32 to vector<1x256xf32>
    %19 = arith.addf %16, %18 : vector<1x256xf32>
    %20 = math.rsqrt %19 : vector<1x256xf32>
    %21 = arith.mulf %17, %20 : vector<1x256xf32>
    %22 = vector.broadcast %21 : vector<1x256xf32> to vector<64x256xf32>
    %23 = arith.mulf %11, %22 : vector<64x256xf32>
    %c0_10 = arith.constant 0 : index
    %c0_11 = arith.constant 0 : index
    %24 = vector.load %arg6[%c0_10, %c0_11] : memref<1x256xf32, #tpu.memory_space<vmem>>, vector<1x256xf32>
    %25 = vector.broadcast %24 : vector<1x256xf32> to vector<64x256xf32>
    %26 = arith.addf %23, %25 : vector<64x256xf32>
    %cst_12 = arith.constant 0.000000e+00 : f32
    %27 = vector.broadcast %cst_12 : f32 to vector<64x256xf32>
    %28 = arith.maximumf %26, %27 : vector<64x256xf32>
    %29 = arith.truncf %28 : vector<64x256xf32> to vector<64x256xbf16>
    %c0_13 = arith.constant 0 : index
    %c0_14 = arith.constant 0 : index
    %30 = vector.load %arg3[%c0_13, %c0_14] : memref<256x128xbf16, #tpu.memory_space<vmem>>, vector<256x128xbf16>
    %cst_15 = arith.constant dense<0.000000e+00> : vector<64x128xf32>
    %31 = tpu.matmul %29, %30, %cst_15 {dimension_numbers = #tpu.dot_dimension_numbers<[1], [0], [0], [1], [0, 0, 1, 1], [], []>} : vector<64x256xbf16>, vector<256x128xbf16>, vector<64x128xf32> -> vector<64x128xf32>
    %cst_16 = arith.constant dense<0.000000e+00> : vector<128xf32>
    %32 = vector.multi_reduction <add>, %31, %cst_16 [0] : vector<64x128xf32> to vector<128xf32>
    %33 = vector.shape_cast %32 : vector<128xf32> to vector<1x128xf32>
    %cst_17 = arith.constant 6.400000e+01 : f32
    %34 = vector.broadcast %cst_17 : f32 to vector<1x128xf32>
    %35 = arith.divf %33, %34 : vector<1x128xf32>
    %36 = vector.broadcast %35 : vector<1x128xf32> to vector<64x128xf32>
    %37 = arith.subf %31, %36 : vector<64x128xf32>
    %38 = arith.mulf %37, %37 : vector<64x128xf32>
    %cst_18 = arith.constant dense<0.000000e+00> : vector<128xf32>
    %39 = vector.multi_reduction <add>, %38, %cst_18 [0] : vector<64x128xf32> to vector<128xf32>
    %40 = vector.shape_cast %39 : vector<128xf32> to vector<1x128xf32>
    %cst_19 = arith.constant 6.400000e+01 : f32
    %41 = vector.broadcast %cst_19 : f32 to vector<1x128xf32>
    %42 = arith.divf %40, %41 : vector<1x128xf32>
    %c0_20 = arith.constant 0 : index
    %c0_21 = arith.constant 0 : index
    %43 = vector.load %arg7[%c0_20, %c0_21] : memref<1x128xf32, #tpu.memory_space<vmem>>, vector<1x128xf32>
    %cst_22 = arith.constant 9.99999974E-6 : f32
    %44 = vector.broadcast %cst_22 : f32 to vector<1x128xf32>
    %45 = arith.addf %42, %44 : vector<1x128xf32>
    %46 = math.rsqrt %45 : vector<1x128xf32>
    %47 = arith.mulf %43, %46 : vector<1x128xf32>
    %48 = vector.broadcast %47 : vector<1x128xf32> to vector<64x128xf32>
    %49 = arith.mulf %37, %48 : vector<64x128xf32>
    %c0_23 = arith.constant 0 : index
    %c0_24 = arith.constant 0 : index
    %50 = vector.load %arg8[%c0_23, %c0_24] : memref<1x128xf32, #tpu.memory_space<vmem>>, vector<1x128xf32>
    %51 = vector.broadcast %50 : vector<1x128xf32> to vector<64x128xf32>
    %52 = arith.addf %49, %51 : vector<64x128xf32>
    %53 = arith.addf %52, %5 : vector<64x128xf32>
    %c0_25 = arith.constant 0 : index
    %c0_26 = arith.constant 0 : index
    %54 = vector.load %arg4[%c0_25, %c0_26] : memref<1x128xf32, #tpu.memory_space<vmem>>, vector<1x128xf32>
    %55 = vector.broadcast %54 : vector<1x128xf32> to vector<64x128xf32>
    %56 = arith.addf %53, %55 : vector<64x128xf32>
    %cst_27 = arith.constant 0.000000e+00 : f32
    %57 = vector.broadcast %cst_27 : f32 to vector<64x128xf32>
    %58 = arith.maximumf %56, %57 : vector<64x128xf32>
    %c0_28 = arith.constant 0 : index
    %c0_29 = arith.constant 0 : index
    %59 = vector.load %arg9[%c0_28, %c0_29] : memref<64x128xf32, #tpu.memory_space<vmem>>, vector<64x128xf32>
    tpu.vector_store %arg9[%c0_28, %c0_29], %58 {strides = array<i32>} : memref<64x128xf32, #tpu.memory_space<vmem>>, vector<64x128xf32>,
    return
  }
  func.func @transform_0(%arg0: i32) -> (i32, i32) {
    %c0_i32 = arith.constant 0 : i32
    %c0_i32_0 = arith.constant 0 : i32
    %c0_i32_1 = arith.constant 0 : i32
    return %c0_i32, %c0_i32_0 : i32, i32
  }
  func.func @transform_1(%arg0: i32) -> (i32, i32) {
    %c0_i32 = arith.constant 0 : i32
    %c0_i32_0 = arith.constant 0 : i32
    %c0_i32_1 = arith.constant 0 : i32
    return %c0_i32, %c0_i32_0 : i32, i32
  }
  func.func @transform_2(%arg0: i32) -> (i32, i32) {
    %c0_i32 = arith.constant 0 : i32
    %c0_i32_0 = arith.constant 0 : i32
    %c0_i32_1 = arith.constant 0 : i32
    return %c0_i32, %c0_i32_0 : i32, i32
  }
  func.func @transform_3(%arg0: i32) -> (i32, i32) {
    %c0_i32 = arith.constant 0 : i32
    %c0_i32_0 = arith.constant 0 : i32
    %c0_i32_1 = arith.constant 0 : i32
    return %c0_i32, %c0_i32_0 : i32, i32
  }
  func.func @transform_4(%arg0: i32) -> (i32, i32) {
    %c0_i32 = arith.constant 0 : i32
    %c0_i32_0 = arith.constant 0 : i32
    %c0_i32_1 = arith.constant 0 : i32
    return %c0_i32, %c0_i32_0 : i32, i32
  }
  func.func @transform_5(%arg0: i32) -> (i32, i32) {
    %c0_i32 = arith.constant 0 : i32
    %c0_i32_0 = arith.constant 0 : i32
    %c0_i32_1 = arith.constant 0 : i32
    return %c0_i32, %c0_i32_0 : i32, i32
  }
  func.func @transform_6(%arg0: i32) -> (i32, i32) {
    %c0_i32 = arith.constant 0 : i32
    %c0_i32_0 = arith.constant 0 : i32
    %c0_i32_1 = arith.constant 0 : i32
    return %c0_i32, %c0_i32_0 : i32, i32
  }
  func.func @transform_7(%arg0: i32) -> (i32, i32) {
    %c0_i32 = arith.constant 0 : i32
    %c0_i32_0 = arith.constant 0 : i32
    %c0_i32_1 = arith.constant 0 : i32
    return %c0_i32, %c0_i32_0 : i32, i32
  }
  func.func @transform_8(%arg0: i32) -> (i32, i32) {
    %c0_i32 = arith.constant 0 : i32
    %c0_i32_0 = arith.constant 0 : i32
    %c0_i32_1 = arith.constant 0 : i32
    return %c0_i32, %c0_i32_0 : i32, i32
  }
}

</mosaic_0001>

<llo_original>
// kernel: baseblock_forward.1
$region0: #{baseblock_forward.1}
  #allocation0 [shape = 'u32[]', space=smem, size = 0x4, offset = 0x4, fixed_abs, tag = 'smem constant byte address 0x4 - core index']
  #allocation1 [shape = 'u32[144,128]{1,0:T(1,128)}', space=vmem, size = 0x12000, scoped, tag = 'internal scratch']
  %s0 = inlined_call_operand.hbm [shape: f32[64,128], index: 0, kind: input, shape index: {}]
  %s1 = inlined_call_operand.hbm [shape: bf16[128,384], index: 1, kind: input, shape index: {}]
  %s2 = inlined_call_operand.hbm [shape: bf16[256,128], index: 2, kind: input, shape index: {}]
  %s3 = inlined_call_operand.vmem [shape: f32[1,128], index: 3, kind: input, shape index: {}]
  %s4 = inlined_call_operand.vmem [shape: f32[1,256], index: 4, kind: input, shape index: {}]
  %s5 = inlined_call_operand.vmem [shape: f32[1,256], index: 5, kind: input, shape index: {}]
  %s6 = inlined_call_operand.vmem [shape: f32[1,128], index: 6, kind: input, shape index: {}]
  %s7 = inlined_call_operand.vmem [shape: f32[1,128], index: 7, kind: input, shape index: {}]
  %s8 = inlined_call_operand.hbm [shape: f32[64,128], index: 8, kind: output, shape index: {}]
  %s9 = sld [smem:[#allocation0]]
  $region54: #{baseblock_forward.1} parent=0
    _
  %s11 = ssub.s32 1, %s9
  %s12 = scalar_select 0, %s11, %s9
  $region1: #{baseblock_forward.1} parent=0
    #allocation2 [shape = 'u8[32768]{0}', space=vmem, size = 0x8000, scoped, tag = 'input window, operand 0, single buffered']
    #allocation3 [shape = 's32[1]{0}', space=sflag, size = 0x4, scoped, tag = 'scoped memory for baseblock_forward.1']
    #allocation4 [shape = 's32[1]{0}', space=sflag, size = 0x4, scoped, tag = 'scoped memory for baseblock_forward.1']
    #allocation5 [shape = 'u8[98304]{0}', space=vmem, size = 0x18000, scoped, tag = 'input window, operand 1, single buffered']
    #allocation6 [shape = 's32[1]{0}', space=sflag, size = 0x4, scoped, tag = 'scoped memory for baseblock_forward.1']
    #allocation7 [shape = 'u8[65536]{0}', space=vmem, size = 0x10000, scoped, tag = 'input window, operand 2, single buffered']
    #allocation8 [shape = 'u8[32768]{0}', space=vmem, size = 0x8000, scoped, tag = 'output window, operand 0, single buffered']
    %13 = vsyncpa [#allocation3], 0
    %14 = vsyncpa [#allocation6], 0
    %15 = vsyncpa [#allocation4], 0
    // Predicated region
    $region2: #{baseblock_forward.1} parent=1 // pred_check
      _
    $region3: #{baseblock_forward.1} parent=1 // pred_check_branch
      %17 = sbr.rel (0) target = $region5
    $region4: #{baseblock_forward.1} parent=1 // pred_region
      %s19 = ssub.s32 1024, 1024
      %20 = vsyncadd [#allocation3], %s19
      %s21 = sshll.u32 [#allocation2], 4
      %s22 = int_to_ptr.vmem [resolvable:$true] %s21
      %27 = dma.hbm_to_vmem [thread:$0]  %s0, 1024, %s22, [#allocation3], 128, 128, 8
    $region5: #{baseblock_forward.1} parent=1 // pred_fallthru
      _
    // Predicated region
    $region6: #{baseblock_forward.1} parent=1 // pred_check
      _
    $region7: #{baseblock_forward.1} parent=1 // pred_check_branch
      %29 = sbr.rel (0) target = $region9
    $region8: #{baseblock_forward.1} parent=1 // pred_region
      %s31 = ssub.s32 3072, 3072
      %32 = vsyncadd [#allocation6], %s31
      %s33 = sshll.u32 [#allocation5], 4
      %s34 = int_to_ptr.vmem [resolvable:$true] %s33
      %39 = dma.hbm_to_vmem [thread:$0]  %s1, 3072, %s34, [#allocation6], 192, 192, 12
    $region9: #{baseblock_forward.1} parent=1 // pred_fallthru
      _
    // Predicated region
    $region10: #{baseblock_forward.1} parent=1 // pred_check
      _
    $region11: #{baseblock_forward.1} parent=1 // pred_check_branch
      %41 = sbr.rel (0) target = $region13
    $region12: #{baseblock_forward.1} parent=1 // pred_region
      %s43 = ssub.s32 2048, 2048
      %44 = vsyncadd [#allocation6], %s43
      %s45 = sshll.u32 [#allocation7], 4
      %s46 = int_to_ptr.vmem [resolvable:$true] %s45
      %51 = dma.hbm_to_vmem [thread:$0]  %s2, 2048, %s46, [#allocation6], 64, 64, 4
    $region13: #{baseblock_forward.1} parent=1 // pred_fallthru
      _
    // Predicated region
    $region14: #{baseblock_forward.1} parent=1 // pred_check
      _
    $region15: #{baseblock_forward.1} parent=1 // pred_check_branch
      %53 = sbr.rel (0) target = $region17
    $region16: #{baseblock_forward.1} parent=1 // pred_region
      _
    $region17: #{baseblock_forward.1} parent=1 // pred_fallthru
      _
    // Predicated region
    $region18: #{baseblock_forward.1} parent=1 // pred_check
      _
    $region19: #{baseblock_forward.1} parent=1 // pred_check_branch
      %55 = sbr.rel (0) target = $region21
    $region20: #{baseblock_forward.1} parent=1 // pred_region
      _
    $region21: #{baseblock_forward.1} parent=1 // pred_fallthru
      _
    // Predicated region
    $region22: #{baseblock_forward.1} parent=1 // pred_check
      _
    $region23: #{baseblock_forward.1} parent=1 // pred_check_branch
      %57 = sbr.rel (0) target = $region25
    $region24: #{baseblock_forward.1} parent=1 // pred_region
      _
    $region25: #{baseblock_forward.1} parent=1 // pred_fallthru
      _
    // Predicated region
    $region26: #{baseblock_forward.1} parent=1 // pred_check
      _
    $region27: #{baseblock_forward.1} parent=1 // pred_check_branch
      %59 = sbr.rel (0) target = $region29
    $region28: #{baseblock_forward.1} parent=1 // pred_region
      _
    $region29: #{baseblock_forward.1} parent=1 // pred_fallthru
      _
    // Predicated region
    $region30: #{baseblock_forward.1} parent=1 // pred_check
      _
    $region31: #{baseblock_forward.1} parent=1 // pred_check_branch
      %61 = sbr.rel (0) target = $region33
    $region32: #{baseblock_forward.1} parent=1 // pred_region
      _
    $region33: #{baseblock_forward.1} parent=1 // pred_fallthru
      _
    // Predicated region
    $region34: #{baseblock_forward.1} parent=1 // pred_check
      _
    $region35: #{baseblock_forward.1} parent=1 // pred_check_branch
      %63 = sbr.rel (0) target = $region37
    $region36: #{baseblock_forward.1} parent=1 // pred_region
      %64 = dma.done [#allocation3], 1024
    $region37: #{baseblock_forward.1} parent=1 // pred_fallthru
      _
    // Predicated region
    $region38: #{baseblock_forward.1} parent=1 // pred_check
      _
    $region39: #{baseblock_forward.1} parent=1 // pred_check_branch
      %66 = sbr.rel (0) target = $region41
    $region40: #{baseblock_forward.1} parent=1 // pred_region
      %67 = dma.done [#allocation6], 3072
    $region41: #{baseblock_forward.1} parent=1 // pred_fallthru
      _
    // Predicated region
    $region42: #{baseblock_forward.1} parent=1 // pred_check
      _
    $region43: #{baseblock_forward.1} parent=1 // pred_check_branch
      %69 = sbr.rel (0) target = $region45
    $region44: #{baseblock_forward.1} parent=1 // pred_region
      %70 = dma.done [#allocation6], 2048
    $region45: #{baseblock_forward.1} parent=1 // pred_fallthru
      _
    %v72 = vld [vmem:[#allocation2] sm:$0xff]
    %v73 = vld [vmem:[#allocation2 + $0x8] sm:$0xff]
    %v74 = vld [vmem:[#allocation2 + $0x10] sm:$0xff]
    %v75 = vld [vmem:[#allocation2 + $0x18] sm:$0xff]
    %v76 = vld [vmem:[#allocation2 + $0x20] sm:$0xff]
    %v77 = vld [vmem:[#allocation2 + $0x28] sm:$0xff]
    %v78 = vld [vmem:[#allocation2 + $0x30] sm:$0xff]
    %v79 = vld [vmem:[#allocation2 + $0x38] sm:$0xff]
    %v80 = vpack.c.bf16 %v73, %v72
    %v81 = vpack.c.bf16 %v75, %v74
    %v82 = vpack.c.bf16 %v77, %v76
    %v83 = vpack.c.bf16 %v79, %v78
    %v84 = vld [vmem:[#allocation5] sm:$0xff]
    %v85 = vld [vmem:[#allocation5 + $0x8] sm:$0xf]
    %v86 = vld [vmem:[#allocation5 + $0xc] sm:$0xff]
    %v87 = vld [vmem:[#allocation5 + $0x14] sm:$0xf]
    %v88 = vld [vmem:[#allocation5 + $0x18] sm:$0xff]
    %v89 = vld [vmem:[#allocation5 + $0x20] sm:$0xf]
    %v90 = vld [vmem:[#allocation5 + $0x24] sm:$0xff]
    %v91 = vld [vmem:[#allocation5 + $0x2c] sm:$0xf]
    %v92 = vld [vmem:[#allocation5 + $0x30] sm:$0xff]
    %v93 = vld [vmem:[#allocation5 + $0x38] sm:$0xf]
    %v94 = vld [vmem:[#allocation5 + $0x3c] sm:$0xff]
    %v95 = vld [vmem:[#allocation5 + $0x44] sm:$0xf]
    %v96 = vld [vmem:[#allocation5 + $0x48] sm:$0xff]
    %v97 = vld [vmem:[#allocation5 + $0x50] sm:$0xf]
    %v98 = vld [vmem:[#allocation5 + $0x54] sm:$0xff]
    %v99 = vld [vmem:[#allocation5 + $0x5c] sm:$0xf]
    %v100 = vld [vmem:[#allocation5 + $0x60] sm:$0xff]
    %v101 = vld [vmem:[#allocation5 + $0x68] sm:$0xf]
    %v102 = vld [vmem:[#allocation5 + $0x6c] sm:$0xff]
    %v103 = vld [vmem:[#allocation5 + $0x74] sm:$0xf]
    %v104 = vld [vmem:[#allocation5 + $0x78] sm:$0xff]
    %v105 = vld [vmem:[#allocation5 + $0x80] sm:$0xf]
    %v106 = vld [vmem:[#allocation5 + $0x84] sm:$0xff]
    %v107 = vld [vmem:[#allocation5 + $0x8c] sm:$0xf]
    %v108 = vld [vmem:[#allocation5 + $0x90] sm:$0xff]
    %v109 = vld [vmem:[#allocation5 + $0x98] sm:$0xf]
    %v110 = vld [vmem:[#allocation5 + $0x9c] sm:$0xff]
    %v111 = vld [vmem:[#allocation5 + $0xa4] sm:$0xf]
    %v112 = vld [vmem:[#allocation5 + $0xa8] sm:$0xff]
    %v113 = vld [vmem:[#allocation5 + $0xb0] sm:$0xf]
    %v114 = vld [vmem:[#allocation5 + $0xb4] sm:$0xff]
    %v115 = vld [vmem:[#allocation5 + $0xbc] sm:$0xf]
    %v148 = vunpack.c.l.b16 %v84
    %v149 = vunpack.c.h.b16 %v84
    %v150 = vunpack.c.l.b16 %v85
    %v151 = vunpack.c.l.b16 %v86
    %v152 = vunpack.c.h.b16 %v86
    %v153 = vunpack.c.l.b16 %v87
    %v154 = vunpack.c.l.b16 %v88
    %v155 = vunpack.c.h.b16 %v88
    %v156 = vunpack.c.l.b16 %v89
    %v157 = vunpack.c.l.b16 %v90
    %v158 = vunpack.c.h.b16 %v90
    %v159 = vunpack.c.l.b16 %v91
    %v160 = vunpack.c.l.b16 %v92
    %v161 = vunpack.c.h.b16 %v92
    %v162 = vunpack.c.l.b16 %v93
    %v163 = vunpack.c.l.b16 %v94
    %v164 = vunpack.c.h.b16 %v94
    %v165 = vunpack.c.l.b16 %v95
    %v166 = vunpack.c.l.b16 %v96
    %v167 = vunpack.c.h.b16 %v96
    %v168 = vunpack.c.l.b16 %v97
    %v169 = vunpack.c.l.b16 %v98
    %v170 = vunpack.c.h.b16 %v98
    %v171 = vunpack.c.l.b16 %v99
    %v172 = vunpack.c.l.b16 %v100
    %v173 = vunpack.c.h.b16 %v100
    %v174 = vunpack.c.l.b16 %v101
    %v175 = vunpack.c.l.b16 %v102
    %v176 = vunpack.c.h.b16 %v102
    %v177 = vunpack.c.l.b16 %v103
    %v178 = vunpack.c.l.b16 %v104
    %v179 = vunpack.c.h.b16 %v104
    %v180 = vunpack.c.l.b16 %v105
    %v181 = vunpack.c.l.b16 %v106
    %v182 = vunpack.c.h.b16 %v106
    %v183 = vunpack.c.l.b16 %v107
    %v184 = vunpack.c.l.b16 %v108
    %v185 = vunpack.c.h.b16 %v108
    %v186 = vunpack.c.l.b16 %v109
    %v187 = vunpack.c.l.b16 %v110
    %v188 = vunpack.c.h.b16 %v110
    %v189 = vunpack.c.l.b16 %v111
    %v190 = vunpack.c.l.b16 %v112
    %v191 = vunpack.c.h.b16 %v112
    %v192 = vunpack.c.l.b16 %v113
    %v193 = vunpack.c.l.b16 %v114
    %v194 = vunpack.c.h.b16 %v114
    %v195 = vunpack.c.l.b16 %v115
    %v196 = vpack.c.b16 %v151, %v148
    %v197 = vpack.c.b16 %v152, %v149
    %v198 = vpack.c.b16 %v153, %v150
    %v199 = vpack.c.b16 %v157, %v154
    %v200 = vpack.c.b16 %v158, %v155
    %v201 = vpack.c.b16 %v159, %v156
    %v202 = vpack.c.b16 %v163, %v160
    %v203 = vpack.c.b16 %v164, %v161
    %v204 = vpack.c.b16 %v165, %v162
    %v205 = vpack.c.b16 %v169, %v166
    %v206 = vpack.c.b16 %v170, %v167
    %v207 = vpack.c.b16 %v171, %v168
    %v208 = vpack.c.b16 %v175, %v172
    %v209 = vpack.c.b16 %v176, %v173
    %v210 = vpack.c.b16 %v177, %v174
    %v211 = vpack.c.b16 %v181, %v178
    %v212 = vpack.c.b16 %v182, %v179
    %v213 = vpack.c.b16 %v183, %v180
    %v214 = vpack.c.b16 %v187, %v184
    %v215 = vpack.c.b16 %v188, %v185
    %v216 = vpack.c.b16 %v189, %v186
    %v217 = vpack.c.b16 %v193, %v190
    %v218 = vpack.c.b16 %v194, %v191
    %v219 = vpack.c.b16 %v195, %v192
    %244 = vmatprep.subr.bf16.mxu0 %v218
    %245 = vmatpush1.bf16.msra.mxu0 %v217
    %246 = vmatprep.subr.bf16.mxu0 %v215
    %247 = vmatpush1.bf16.msra.mxu0 %v214
    %248 = vmatprep.subr.bf16.mxu0 %v212
    %249 = vmatpush1.bf16.msra.mxu0 %v211
    %250 = vmatprep.subr.bf16.mxu0 %v209
    %251 = vmatpush1.bf16.msra.mxu0 %v208
    %252 = vmatprep.subr.bf16.mxu0 %v206
    %253 = vmatpush1.bf16.msra.mxu0 %v205
    %254 = vmatprep.subr.bf16.mxu0 %v203
    %255 = vmatpush1.bf16.msra.mxu0 %v202
    %256 = vmatprep.subr.bf16.mxu0 %v200
    %257 = vmatpush1.bf16.msra.mxu0 %v199
    %258 = vmatprep.subr.bf16.mxu0 %v197
    %259 = vmatpush1.bf16.msra.mxu0 %v196
    %260 = vmatprep.subr.bf16.mxu0 0
    %261 = vmatpush2.bf16.msra.mxu0 0
    %262 = vmatprep.subr.bf16.mxu0 0
    %263 = vmatpush2.bf16.msra.mxu0 0
    %264 = vmatprep.subr.bf16.mxu0 0
    %265 = vmatpush2.bf16.msra.mxu0 0
    %266 = vmatprep.subr.bf16.mxu0 0
    %267 = vmatpush2.bf16.msra.mxu0 0
    %268 = vmatprep.subr.bf16.mxu0 0
    %269 = vmatpush2.bf16.msra.mxu0 0
    %270 = vmatprep.subr.bf16.mxu0 0
    %271 = vmatpush2.bf16.msra.mxu0 0
    %272 = vmatprep.subr.bf16.mxu0 0
    %273 = vmatpush2.bf16.msra.mxu0 0
    %274 = vmatprep.subr.bf16.mxu0 0
    %275 = vmatpush2.bf16.msra.mxu0 0
    %276 = vmatprep.mubr.bf16.mxu0 0
    %277 = vmatmul.mubr.bf16.gmra.mxu0 %v80
    %v278 = vpop.f32.mrf.mxu0
    %v279 = vadd.f32 0.0, %v278
    %v280 = vpop.f32.mrf.mxu0
    %v281 = vadd.f32 0.0, %v280
    %v282 = vpop.f32.mrf.mxu0
    %v283 = vadd.f32 0.0, %v282
    %v284 = vpop.f32.mrf.mxu0
    %v285 = vadd.f32 0.0, %v284
    %286 = vmatprep.mubr.bf16.mxu0 0
    %287 = vmatmul.mubr.bf16.gmra.mxu0 %v81
    %v288 = vpop.f32.mrf.mxu0
    %v289 = vadd.f32 0.0, %v288
    %v290 = vpop.f32.mrf.mxu0
    %v291 = vadd.f32 0.0, %v290
    %v292 = vpop.f32.mrf.mxu0
    %v293 = vadd.f32 0.0, %v292
    %v294 = vpop.f32.mrf.mxu0
    %v295 = vadd.f32 0.0, %v294
    %296 = vmatprep.mubr.bf16.mxu0 0
    %297 = vmatmul.mubr.bf16.gmra.mxu0 %v82
    %v298 = vpop.f32.mrf.mxu0
    %v299 = vadd.f32 0.0, %v298
    %v300 = vpop.f32.mrf.mxu0
    %v301 = vadd.f32 0.0, %v300
    %v302 = vpop.f32.mrf.mxu0
    %v303 = vadd.f32 0.0, %v302
    %v304 = vpop.f32.mrf.mxu0
    %v305 = vadd.f32 0.0, %v304
    %306 = vmatprep.mubr.bf16.mxu0 0
    %307 = vmatmul.mubr.bf16.gmra.mxu0 %v83
    %v308 = vpop.f32.mrf.mxu0
    %v309 = vadd.f32 0.0, %v308
    %v310 = vpop.f32.mrf.mxu0
    %v311 = vadd.f32 0.0, %v310
    %v312 = vpop.f32.mrf.mxu0
    %v313 = vadd.f32 0.0, %v312
    %v314 = vpop.f32.mrf.mxu0
    %v315 = vadd.f32 0.0, %v314
    %316 = vdwg.mxu0
    %317 = vmatprep.subr.bf16.mxu0 0
    %318 = vmatpush1.bf16.msra.mxu0 %v219
    %319 = vmatprep.subr.bf16.mxu0 0
    %320 = vmatpush1.bf16.msra.mxu0 %v216
    %321 = vmatprep.subr.bf16.mxu0 0
    %322 = vmatpush1.bf16.msra.mxu0 %v213
    %323 = vmatprep.subr.bf16.mxu0 0
    %324 = vmatpush1.bf16.msra.mxu0 %v210
    %325 = vmatprep.subr.bf16.mxu0 0
    %326 = vmatpush1.bf16.msra.mxu0 %v207
    %327 = vmatprep.subr.bf16.mxu0 0
    %328 = vmatpush1.bf16.msra.mxu0 %v204
    %329 = vmatprep.subr.bf16.mxu0 0
    %330 = vmatpush1.bf16.msra.mxu0 %v201
    %331 = vmatprep.subr.bf16.mxu0 0
    %332 = vmatpush1.bf16.msra.mxu0 %v198
    %333 = vmatprep.subr.bf16.mxu0 0
    %334 = vmatpush2.bf16.msra.mxu0 0
    %335 = vmatprep.subr.bf16.mxu0 0
    %336 = vmatpush2.bf16.msra.mxu0 0
    %337 = vmatprep.subr.bf16.mxu0 0
    %338 = vmatpush2.bf16.msra.mxu0 0
    %339 = vmatprep.subr.bf16.mxu0 0
    %340 = vmatpush2.bf16.msra.mxu0 0
    %341 = vmatprep.subr.bf16.mxu0 0
    %342 = vmatpush2.bf16.msra.mxu0 0
    %343 = vmatprep.subr.bf16.mxu0 0
    %344 = vmatpush2.bf16.msra.mxu0 0
    %345 = vmatprep.subr.bf16.mxu0 0
    %346 = vmatpush2.bf16.msra.mxu0 0
    %347 = vmatprep.subr.bf16.mxu0 0
    %348 = vmatpush2.bf16.msra.mxu0 0
    %349 = vmatprep.mubr.bf16.mxu0 0
    %350 = vmatmul.mubr.bf16.gmra.mxu0 %v80
    %v351 = vpop.f32.mrf.mxu0
    %v352 = vadd.f32 0.0, %v351
    %v353 = vpop.f32.mrf.mxu0
    %v354 = vpop.f32.mrf.mxu0
    %v355 = vadd.f32 0.0, %v354
    %v356 = vpop.f32.mrf.mxu0
    %357 = vmatprep.mubr.bf16.mxu0 0
    %358 = vmatmul.mubr.bf16.gmra.mxu0 %v81
    %v359 = vpop.f32.mrf.mxu0
    %v360 = vadd.f32 0.0, %v359
    %v361 = vpop.f32.mrf.mxu0
    %v362 = vpop.f32.mrf.mxu0
    %v363 = vadd.f32 0.0, %v362
    %v364 = vpop.f32.mrf.mxu0
    %365 = vmatprep.mubr.bf16.mxu0 0
    %366 = vmatmul.mubr.bf16.gmra.mxu0 %v82
    %v367 = vpop.f32.mrf.mxu0
    %v368 = vadd.f32 0.0, %v367
    %v369 = vpop.f32.mrf.mxu0
    %v370 = vpop.f32.mrf.mxu0
    %v371 = vadd.f32 0.0, %v370
    %v372 = vpop.f32.mrf.mxu0
    %373 = vmatprep.mubr.bf16.mxu0 0
    %374 = vmatmul.mubr.bf16.gmra.mxu0 %v83
    %v375 = vpop.f32.mrf.mxu0
    %v376 = vadd.f32 0.0, %v375
    %v377 = vpop.f32.mrf.mxu0
    %v378 = vpop.f32.mrf.mxu0
    %v379 = vadd.f32 0.0, %v378
    %v380 = vpop.f32.mrf.mxu0
    %381 = vdwg.mxu0
    %v382 = vadd.f32 %v279, %v283
    %v383 = vadd.f32 %v382, %v289
    %v384 = vadd.f32 %v383, %v293
    %v385 = vadd.f32 %v384, %v299
    %v386 = vadd.f32 %v385, %v303
    %v387 = vadd.f32 %v386, %v309
    %v388 = vadd.f32 %v387, %v313
    %v389 = vrot.slane %v388, 4
    %v390 = vadd.f32 %v388, %v389
    %v391 = vrot.slane %v390, 2
    %v392 = vadd.f32 %v390, %v391
    %v393 = vrot.slane %v392, 1
    %v394 = vadd.f32 %v392, %v393
    %v395 = vadd.f32 %v281, %v285
    %v396 = vadd.f32 %v395, %v291
    %v397 = vadd.f32 %v396, %v295
    %v398 = vadd.f32 %v397, %v301
    %v399 = vadd.f32 %v398, %v305
    %v400 = vadd.f32 %v399, %v311
    %v401 = vadd.f32 %v400, %v315
    %v402 = vrot.slane %v401, 4
    %v403 = vadd.f32 %v401, %v402
    %v404 = vrot.slane %v403, 2
    %v405 = vadd.f32 %v403, %v404
    %v406 = vrot.slane %v405, 1
    %v407 = vadd.f32 %v405, %v406
    %v408 = vrcp.pop 64.0
    %v409 = vmul.f32 %v394, %v408
    %v410 = vmul.f32 %v407, %v408
    %v411 = vsub.f32 %v279, %v409
    %v412 = vsub.f32 %v281, %v410
    %v413 = vsub.f32 %v283, %v409
    %v414 = vsub.f32 %v285, %v410
    %v415 = vsub.f32 %v289, %v409
    %v416 = vsub.f32 %v291, %v410
    %v417 = vsub.f32 %v293, %v409
    %v418 = vsub.f32 %v295, %v410
    %v419 = vsub.f32 %v299, %v409
    %v420 = vsub.f32 %v301, %v410
    %v421 = vsub.f32 %v303, %v409
    %v422 = vsub.f32 %v305, %v410
    %v423 = vsub.f32 %v309, %v409
    %v424 = vsub.f32 %v311, %v410
    %v425 = vsub.f32 %v313, %v409
    %v426 = vsub.f32 %v315, %v410
    %v427 = vmul.f32 %v411, %v411
    %v428 = vmul.f32 %v412, %v412
    %v429 = vmul.f32 %v413, %v413
    %v430 = vmul.f32 %v414, %v414
    %v431 = vmul.f32 %v415, %v415
    %v432 = vmul.f32 %v416, %v416
    %v433 = vmul.f32 %v417, %v417
    %v434 = vmul.f32 %v418, %v418
    %v435 = vmul.f32 %v419, %v419
    %v436 = vmul.f32 %v420, %v420
    %v437 = vmul.f32 %v421, %v421
    %v438 = vmul.f32 %v422, %v422
    %v439 = vmul.f32 %v423, %v423
    %v440 = vmul.f32 %v424, %v424
    %v441 = vmul.f32 %v425, %v425
    %v442 = vmul.f32 %v426, %v426
    %v443 = vadd.f32 %v427, %v429
    %v444 = vadd.f32 %v443, %v431
    %v445 = vadd.f32 %v444, %v433
    %v446 = vadd.f32 %v445, %v435
    %v447 = vadd.f32 %v446, %v437
    %v448 = vadd.f32 %v447, %v439
    %v449 = vadd.f32 %v448, %v441
    %v450 = vrot.slane %v449, 4
    %v451 = vadd.f32 %v449, %v450
    %v452 = vrot.slane %v451, 2
    %v453 = vadd.f32 %v451, %v452
    %v454 = vrot.slane %v453, 1
    %v455 = vadd.f32 %v453, %v454
    %v456 = vadd.f32 %v428, %v430
    %v457 = vadd.f32 %v456, %v432
    %v458 = vadd.f32 %v457, %v434
    %v459 = vadd.f32 %v458, %v436
    %v460 = vadd.f32 %v459, %v438
    %v461 = vadd.f32 %v460, %v440
    %v462 = vadd.f32 %v461, %v442
    %v463 = vrot.slane %v462, 4
    %v464 = vadd.f32 %v462, %v463
    %v465 = vrot.slane %v464, 2
    %v466 = vadd.f32 %v464, %v465
    %v467 = vrot.slane %v466, 1
    %v468 = vadd.f32 %v466, %v467
    %v469 = vmul.f32 %v455, %v408
    %v470 = vmul.f32 %v468, %v408
    %v471 = vld [vmem:[%s4] sm:$0x3]
    %v472 = vadd.f32 %v469, 1e-05
    %v473 = vadd.f32 %v470, 1e-05
    %v474 = vrsqrt.pop %v472
    %v475 = vrsqrt.pop %v473
    %v478 = vcombine.low %v474, %v475
    %v480 = vunpack.c.l.s4 1966171168
    %v481 = vunpack.c.0.s8 %v480
    %v482 = vlaneseq
    %v483 = vshrl.u32 %v482, 7
    %v484 = vsub.s32 %v481, %v483
    %v485 = vrot.slane %v478, %v484
    %v487 = vunpack.c.l.s4 1966171168
    %v488 = vunpack.c.0.s8 %v487
    %v489 = vlaneseq
    %v490 = vshrl.u32 %v489, 7
    %v491 = vsub.s32 %v488, %v490
    %v492 = vrot.slane %v485, %v491
    %v494 = vmul.f32 %v471, %v492
    %v496 = vlaneseq
    %v497 = vshrl.u32 %v496, 7
    %v498 = vsub.s32 0, %v497
    %v499 = vrot.slane %v494, %v498
    %v500 = vlaneseq
    %v501 = vshrl.u32 %v500, 7
    %v502 = vsub.s32 1, %v501
    %v503 = vrot.slane %v494, %v502
    %v506 = vmul.f32 %v411, %v499
    %v507 = vmul.f32 %v412, %v503
    %v508 = vmul.f32 %v413, %v499
    %v509 = vmul.f32 %v414, %v503
    %v510 = vmul.f32 %v415, %v499
    %v511 = vmul.f32 %v416, %v503
    %v512 = vmul.f32 %v417, %v499
    %v513 = vmul.f32 %v418, %v503
    %v514 = vmul.f32 %v419, %v499
    %v515 = vmul.f32 %v420, %v503
    %v516 = vmul.f32 %v421, %v499
    %v517 = vmul.f32 %v422, %v503
    %v518 = vmul.f32 %v423, %v499
    %v519 = vmul.f32 %v424, %v503
    %v520 = vmul.f32 %v425, %v499
    %v521 = vmul.f32 %v426, %v503
    %v522 = vld [vmem:[%s5] sm:$0x3]
    %v524 = vlaneseq
    %v525 = vshrl.u32 %v524, 7
    %v526 = vsub.s32 0, %v525
    %v527 = vrot.slane %v522, %v526
    %v528 = vlaneseq
    %v529 = vshrl.u32 %v528, 7
    %v530 = vsub.s32 1, %v529
    %v531 = vrot.slane %v522, %v530
    %v534 = vadd.f32 %v506, %v527
    %v535 = vadd.f32 %v507, %v531
    %v536 = vadd.f32 %v508, %v527
    %v537 = vadd.f32 %v509, %v531
    %v538 = vadd.f32 %v510, %v527
    %v539 = vadd.f32 %v511, %v531
    %v540 = vadd.f32 %v512, %v527
    %v541 = vadd.f32 %v513, %v531
    %v542 = vadd.f32 %v514, %v527
    %v543 = vadd.f32 %v515, %v531
    %v544 = vadd.f32 %v516, %v527
    %v545 = vadd.f32 %v517, %v531
    %v546 = vadd.f32 %v518, %v527
    %v547 = vadd.f32 %v519, %v531
    %v548 = vadd.f32 %v520, %v527
    %v549 = vadd.f32 %v521, %v531
    %v550 = vmax.f32 %v534, 0.0
    %v551 = vmax.f32 %v535, 0.0
    %v552 = vmax.f32 %v536, 0.0
    %v553 = vmax.f32 %v537, 0.0
    %v554 = vmax.f32 %v538, 0.0
    %v555 = vmax.f32 %v539, 0.0
    %v556 = vmax.f32 %v540, 0.0
    %v557 = vmax.f32 %v541, 0.0
    %v558 = vmax.f32 %v542, 0.0
    %v559 = vmax.f32 %v543, 0.0
    %v560 = vmax.f32 %v544, 0.0
    %v561 = vmax.f32 %v545, 0.0
    %v562 = vmax.f32 %v546, 0.0
    %v563 = vmax.f32 %v547, 0.0
    %v564 = vmax.f32 %v548, 0.0
    %v565 = vmax.f32 %v549, 0.0
    %v566 = vpack.c.bf16 %v552, %v550
    %v567 = vpack.c.bf16 %v553, %v551
    %v568 = vpack.c.bf16 %v556, %v554
    %v569 = vpack.c.bf16 %v557, %v555
    %v570 = vpack.c.bf16 %v560, %v558
    %v571 = vpack.c.bf16 %v561, %v559
    %v572 = vpack.c.bf16 %v564, %v562
    %v573 = vpack.c.bf16 %v565, %v563
    %v574 = vld [vmem:[#allocation7] sm:$0xf]
    %v575 = vld [vmem:[#allocation7 + $0x4] sm:$0xf]
    %v576 = vld [vmem:[#allocation7 + $0x8] sm:$0xf]
    %v577 = vld [vmem:[#allocation7 + $0xc] sm:$0xf]
    %v578 = vld [vmem:[#allocation7 + $0x10] sm:$0xf]
    %v579 = vld [vmem:[#allocation7 + $0x14] sm:$0xf]
    %v580 = vld [vmem:[#allocation7 + $0x18] sm:$0xf]
    %v581 = vld [vmem:[#allocation7 + $0x1c] sm:$0xf]
    %v582 = vld [vmem:[#allocation7 + $0x20] sm:$0xf]
    %v583 = vld [vmem:[#allocation7 + $0x24] sm:$0xf]
    %v584 = vld [vmem:[#allocation7 + $0x28] sm:$0xf]
    %v585 = vld [vmem:[#allocation7 + $0x2c] sm:$0xf]
    %v586 = vld [vmem:[#allocation7 + $0x30] sm:$0xf]
    %v587 = vld [vmem:[#allocation7 + $0x34] sm:$0xf]
    %v588 = vld [vmem:[#allocation7 + $0x38] sm:$0xf]
    %v589 = vld [vmem:[#allocation7 + $0x3c] sm:$0xf]
    %v590 = vld [vmem:[#allocation7 + $0x40] sm:$0xf]
    %v591 = vld [vmem:[#allocation7 + $0x44] sm:$0xf]
    %v592 = vld [vmem:[#allocation7 + $0x48] sm:$0xf]
    %v593 = vld [vmem:[#allocation7 + $0x4c] sm:$0xf]
    %v594 = vld [vmem:[#allocation7 + $0x50] sm:$0xf]
    %v595 = vld [vmem:[#allocation7 + $0x54] sm:$0xf]
    %v596 = vld [vmem:[#allocation7 + $0x58] sm:$0xf]
    %v597 = vld [vmem:[#allocation7 + $0x5c] sm:$0xf]
    %v598 = vld [vmem:[#allocation7 + $0x60] sm:$0xf]
    %v599 = vld [vmem:[#allocation7 + $0x64] sm:$0xf]
    %v600 = vld [vmem:[#allocation7 + $0x68] sm:$0xf]
    %v601 = vld [vmem:[#allocation7 + $0x6c] sm:$0xf]
    %v602 = vld [vmem:[#allocation7 + $0x70] sm:$0xf]
    %v603 = vld [vmem:[#allocation7 + $0x74] sm:$0xf]
    %v604 = vld [vmem:[#allocation7 + $0x78] sm:$0xf]
    %v605 = vld [vmem:[#allocation7 + $0x7c] sm:$0xf]
    %v638 = vunpack.c.l.b16 %v574
    %v639 = vunpack.c.l.b16 %v575
    %v640 = vunpack.c.l.b16 %v576
    %v641 = vunpack.c.l.b16 %v577
    %v642 = vunpack.c.l.b16 %v578
    %v643 = vunpack.c.l.b16 %v579
    %v644 = vunpack.c.l.b16 %v580
    %v645 = vunpack.c.l.b16 %v581
    %v646 = vunpack.c.l.b16 %v582
    %v647 = vunpack.c.l.b16 %v583
    %v648 = vunpack.c.l.b16 %v584
    %v649 = vunpack.c.l.b16 %v585
    %v650 = vunpack.c.l.b16 %v586
    %v651 = vunpack.c.l.b16 %v587
    %v652 = vunpack.c.l.b16 %v588
    %v653 = vunpack.c.l.b16 %v589
    %v654 = vunpack.c.l.b16 %v590
    %v655 = vunpack.c.l.b16 %v591
    %v656 = vunpack.c.l.b16 %v592
    %v657 = vunpack.c.l.b16 %v593
    %v658 = vunpack.c.l.b16 %v594
    %v659 = vunpack.c.l.b16 %v595
    %v660 = vunpack.c.l.b16 %v596
    %v661 = vunpack.c.l.b16 %v597
    %v662 = vunpack.c.l.b16 %v598
    %v663 = vunpack.c.l.b16 %v599
    %v664 = vunpack.c.l.b16 %v600
    %v665 = vunpack.c.l.b16 %v601
    %v666 = vunpack.c.l.b16 %v602
    %v667 = vunpack.c.l.b16 %v603
    %v668 = vunpack.c.l.b16 %v604
    %v669 = vunpack.c.l.b16 %v605
    %v670 = vpack.c.b16 %v639, %v638
    %v671 = vpack.c.b16 %v641, %v640
    %v672 = vpack.c.b16 %v643, %v642
    %v673 = vpack.c.b16 %v645, %v644
    %v674 = vpack.c.b16 %v647, %v646
    %v675 = vpack.c.b16 %v649, %v648
    %v676 = vpack.c.b16 %v651, %v650
    %v677 = vpack.c.b16 %v653, %v652
    %v678 = vpack.c.b16 %v655, %v654
    %v679 = vpack.c.b16 %v657, %v656
    %v680 = vpack.c.b16 %v659, %v658
    %v681 = vpack.c.b16 %v661, %v660
    %v682 = vpack.c.b16 %v663, %v662
    %v683 = vpack.c.b16 %v665, %v664
    %v684 = vpack.c.b16 %v667, %v666
    %v685 = vpack.c.b16 %v669, %v668
    %702 = vmatprep.subr.bf16.mxu0 0
    %703 = vmatpush1.bf16.msra.mxu0 %v677
    %704 = vmatprep.subr.bf16.mxu0 0
    %705 = vmatpush1.bf16.msra.mxu0 %v676
    %706 = vmatprep.subr.bf16.mxu0 0
    %707 = vmatpush1.bf16.msra.mxu0 %v675
    %708 = vmatprep.subr.bf16.mxu0 0
    %709 = vmatpush1.bf16.msra.mxu0 %v674
    %710 = vmatprep.subr.bf16.mxu0 0
    %711 = vmatpush1.bf16.msra.mxu0 %v673
    %712 = vmatprep.subr.bf16.mxu0 0
    %713 = vmatpush1.bf16.msra.mxu0 %v672
    %714 = vmatprep.subr.bf16.mxu0 0
    %715 = vmatpush1.bf16.msra.mxu0 %v671
    %716 = vmatprep.subr.bf16.mxu0 0
    %717 = vmatpush1.bf16.msra.mxu0 %v670
    %718 = vmatprep.subr.bf16.mxu0 0
    %719 = vmatpush2.bf16.msra.mxu0 %v685
    %720 = vmatprep.subr.bf16.mxu0 0
    %721 = vmatpush2.bf16.msra.mxu0 %v684
    %722 = vmatprep.subr.bf16.mxu0 0
    %723 = vmatpush2.bf16.msra.mxu0 %v683
    %724 = vmatprep.subr.bf16.mxu0 0
    %725 = vmatpush2.bf16.msra.mxu0 %v682
    %726 = vmatprep.subr.bf16.mxu0 0
    %727 = vmatpush2.bf16.msra.mxu0 %v681
    %728 = vmatprep.subr.bf16.mxu0 0
    %729 = vmatpush2.bf16.msra.mxu0 %v680
    %730 = vmatprep.subr.bf16.mxu0 0
    %731 = vmatpush2.bf16.msra.mxu0 %v679
    %732 = vmatprep.subr.bf16.mxu0 0
    %733 = vmatpush2.bf16.msra.mxu0 %v678
    %734 = vmatprep.mubr.bf16.mxu0 %v567
    %735 = vmatmul.mubr.bf16.gmra.mxu0 %v566
    %v736 = vpop.f32.mrf.mxu0
    %v737 = vadd.f32 0.0, %v736
    %v738 = vpop.f32.mrf.mxu0
    %v739 = vpop.f32.mrf.mxu0
    %v740 = vadd.f32 0.0, %v739
    %v741 = vpop.f32.mrf.mxu0
    %742 = vmatprep.mubr.bf16.mxu0 %v569
    %743 = vmatmul.mubr.bf16.gmra.mxu0 %v568
    %v744 = vpop.f32.mrf.mxu0
    %v745 = vadd.f32 0.0, %v744
    %v746 = vpop.f32.mrf.mxu0
    %v747 = vpop.f32.mrf.mxu0
    %v748 = vadd.f32 0.0, %v747
    %v749 = vpop.f32.mrf.mxu0
    %750 = vmatprep.mubr.bf16.mxu0 %v571
    %751 = vmatmul.mubr.bf16.gmra.mxu0 %v570
    %v752 = vpop.f32.mrf.mxu0
    %v753 = vadd.f32 0.0, %v752
    %v754 = vpop.f32.mrf.mxu0
    %v755 = vpop.f32.mrf.mxu0
    %v756 = vadd.f32 0.0, %v755
    %v757 = vpop.f32.mrf.mxu0
    %758 = vmatprep.mubr.bf16.mxu0 %v573
    %759 = vmatmul.mubr.bf16.gmra.mxu0 %v572
    %v760 = vpop.f32.mrf.mxu0
    %v761 = vadd.f32 0.0, %v760
    %v762 = vpop.f32.mrf.mxu0
    %v763 = vpop.f32.mrf.mxu0
    %v764 = vadd.f32 0.0, %v763
    %v765 = vpop.f32.mrf.mxu0
    %766 = vdwg.mxu0
    %v767 = vadd.f32 %v737, %v740
    %v768 = vadd.f32 %v767, %v745
    %v769 = vadd.f32 %v768, %v748
    %v770 = vadd.f32 %v769, %v753
    %v771 = vadd.f32 %v770, %v756
    %v772 = vadd.f32 %v771, %v761
    %v773 = vadd.f32 %v772, %v764
    %v774 = vrot.slane %v773, 4
    %v775 = vadd.f32 %v773, %v774
    %v776 = vrot.slane %v775, 2
    %v777 = vadd.f32 %v775, %v776
    %v778 = vrot.slane %v777, 1
    %v779 = vadd.f32 %v777, %v778
    %v780 = vmul.f32 %v779, %v408
    %v781 = vsub.f32 %v737, %v780
    %v782 = vsub.f32 %v740, %v780
    %v783 = vsub.f32 %v745, %v780
    %v784 = vsub.f32 %v748, %v780
    %v785 = vsub.f32 %v753, %v780
    %v786 = vsub.f32 %v756, %v780
    %v787 = vsub.f32 %v761, %v780
    %v788 = vsub.f32 %v764, %v780
    %v789 = vmul.f32 %v781, %v781
    %v790 = vmul.f32 %v782, %v782
    %v791 = vmul.f32 %v783, %v783
    %v792 = vmul.f32 %v784, %v784
    %v793 = vmul.f32 %v785, %v785
    %v794 = vmul.f32 %v786, %v786
    %v795 = vmul.f32 %v787, %v787
    %v796 = vmul.f32 %v788, %v788
    %v797 = vadd.f32 %v789, %v790
    %v798 = vadd.f32 %v797, %v791
    %v799 = vadd.f32 %v798, %v792
    %v800 = vadd.f32 %v799, %v793
    %v801 = vadd.f32 %v800, %v794
    %v802 = vadd.f32 %v801, %v795
    %v803 = vadd.f32 %v802, %v796
    %v804 = vrot.slane %v803, 4
    %v805 = vadd.f32 %v803, %v804
    %v806 = vrot.slane %v805, 2
    %v807 = vadd.f32 %v805, %v806
    %v808 = vrot.slane %v807, 1
    %v809 = vadd.f32 %v807, %v808
    %v810 = vmul.f32 %v809, %v408
    %v811 = vld [vmem:[%s6] sm:$0x1]
    %v812 = vadd.f32 %v810, 1e-05
    %v813 = vrsqrt.pop %v812
    %v814 = vmul.f32 %v811, %v813
    %v816 = vlaneseq
    %v817 = vshrl.u32 %v816, 7
    %v818 = vsub.s32 0, %v817
    %v819 = vrot.slane %v814, %v818
    %v821 = vmul.f32 %v781, %v819
    %v822 = vmul.f32 %v782, %v819
    %v823 = vmul.f32 %v783, %v819
    %v824 = vmul.f32 %v784, %v819
    %v825 = vmul.f32 %v785, %v819
    %v826 = vmul.f32 %v786, %v819
    %v827 = vmul.f32 %v787, %v819
    %v828 = vmul.f32 %v788, %v819
    %v829 = vld [vmem:[%s7] sm:$0x1]
    %v831 = vlaneseq
    %v832 = vshrl.u32 %v831, 7
    %v833 = vsub.s32 0, %v832
    %v834 = vrot.slane %v829, %v833
    %v836 = vadd.f32 %v821, %v834
    %v837 = vadd.f32 %v822, %v834
    %v838 = vadd.f32 %v823, %v834
    %v839 = vadd.f32 %v824, %v834
    %v840 = vadd.f32 %v825, %v834
    %v841 = vadd.f32 %v826, %v834
    %v842 = vadd.f32 %v827, %v834
    %v843 = vadd.f32 %v828, %v834
    %v844 = vadd.f32 %v836, %v352
    %v845 = vadd.f32 %v837, %v355
    %v846 = vadd.f32 %v838, %v360
    %v847 = vadd.f32 %v839, %v363
    %v848 = vadd.f32 %v840, %v368
    %v849 = vadd.f32 %v841, %v371
    %v850 = vadd.f32 %v842, %v376
    %v851 = vadd.f32 %v843, %v379
    %v852 = vld [vmem:[%s3] sm:$0x1]
    %v854 = vlaneseq
    %v855 = vshrl.u32 %v854, 7
    %v856 = vsub.s32 0, %v855
    %v857 = vrot.slane %v852, %v856
    %v859 = vadd.f32 %v844, %v857
    %v860 = vadd.f32 %v845, %v857
    %v861 = vadd.f32 %v846, %v857
    %v862 = vadd.f32 %v847, %v857
    %v863 = vadd.f32 %v848, %v857
    %v864 = vadd.f32 %v849, %v857
    %v865 = vadd.f32 %v850, %v857
    %v866 = vadd.f32 %v851, %v857
    %v867 = vmax.f32 %v859, 0.0
    %v868 = vmax.f32 %v860, 0.0
    %v869 = vmax.f32 %v861, 0.0
    %v870 = vmax.f32 %v862, 0.0
    %v871 = vmax.f32 %v863, 0.0
    %v872 = vmax.f32 %v864, 0.0
    %v873 = vmax.f32 %v865, 0.0
    %v874 = vmax.f32 %v866, 0.0
    %875 = vst [vmem:[#allocation8] sm:$0xff] %v867
    %876 = vst [vmem:[#allocation8 + $0x8] sm:$0xff] %v868
    %877 = vst [vmem:[#allocation8 + $0x10] sm:$0xff] %v869
    %878 = vst [vmem:[#allocation8 + $0x18] sm:$0xff] %v870
    %879 = vst [vmem:[#allocation8 + $0x20] sm:$0xff] %v871
    %880 = vst [vmem:[#allocation8 + $0x28] sm:$0xff] %v872
    %881 = vst [vmem:[#allocation8 + $0x30] sm:$0xff] %v873
    %882 = vst [vmem:[#allocation8 + $0x38] sm:$0xff] %v874
    // Predicated region
    $region46: #{baseblock_forward.1} parent=1 // pred_check
      _
    $region47: #{baseblock_forward.1} parent=1 // pred_check_branch
      %884 = sbr.rel (0) target = $region49
    $region48: #{baseblock_forward.1} parent=1 // pred_region
      %s886 = ssub.s32 1024, 1024
      %887 = vsyncadd [#allocation4], %s886
      %s888 = sshll.u32 [#allocation8], 4
      %s889 = int_to_ptr.vmem [resolvable:$true] %s888
      %894 = dma.vmem_to_hbm [thread:$0]  %s889, 1024, %s8, [#allocation4], 128, 128, 8
    $region49: #{baseblock_forward.1} parent=1 // pred_fallthru
      _
    // Predicated region
    $region50: #{baseblock_forward.1} parent=1 // pred_check
      _
    $region51: #{baseblock_forward.1} parent=1 // pred_check_branch
      %896 = sbr.rel (0) target = $region53
    $region52: #{baseblock_forward.1} parent=1 // pred_region
      %897 = dma.done [#allocation4], 1024
    $region53: #{baseblock_forward.1} parent=1 // pred_fallthru
      _
    %898 = vsyncpa [#allocation3], 1
    %899 = vsyncpa [#allocation6], 1
    %900 = vsyncpa [#allocation4], 1

</llo_original>
